<compile_context>
chip_gen: v7x
topology: tpu7x:2x2x1
jax: 0.10.0
libtpu: 0.0.40
codegen_flags: <defaults>
</compile_context>

<pallas_src>
import jax
import jax.numpy as jnp
from jax.experimental import pallas as pl
from jax.experimental.pallas import tpu as pltpu


def _pointwise_conv_kernel(x_ref, w_ref, b_ref, o_ref):
    # x_ref: (1, C_in, ts)   w_ref: (tc, C_in)   b_ref: (tc, 1)   o_ref: (1, tc, ts)
    acc = jnp.dot(w_ref[...], x_ref[0], preferred_element_type=jnp.float32)
    o_ref[0] = (acc + b_ref[...].astype(jnp.float32)).astype(o_ref.dtype)


def pointwise_conv(x_nchw, weight, bias, *, ts=512, tc=256, compute_dtype=None):
    """1x1 conv, stride 1, padding 0, groups 1 (matches nn.Conv2d semantics).

    x_nchw: (N, C_in, H, W)
    weight: (C_out, C_in) or (C_out, C_in, 1, 1)
    bias:   (C_out,)
    compute_dtype: optional (e.g. jnp.bfloat16) dtype for x/w HBM traffic;
                   accumulation + bias-add stay in f32, output keeps x's dtype.
    returns (N, C_out, H, W)
    """
    N, C_in, H, W = x_nchw.shape
    C_out = weight.shape[0]
    weight = weight.reshape(C_out, C_in)
    out_dtype = x_nchw.dtype
    HW = H * W

    if compute_dtype is not None:
        x_nchw = x_nchw.astype(compute_dtype)
        weight = weight.astype(compute_dtype)

    # Free (layout-preserving) reshape: spatial becomes the lane axis.
    x = x_nchw.reshape(N, C_in, HW)
    b = bias.astype(jnp.float32).reshape(C_out, 1)

    # Spatial tile: multiple of 128 lanes, no larger than the (rounded-up) array.
    ts = max(128, min(ts, ((HW + 127) // 128) * 128))
    # C_out tile: either the full C_out or a multiple-of-8 chunk.
    tc = min(tc, C_out)

    grid = (N, pl.cdiv(C_out, tc), pl.cdiv(HW, ts))

    itemsize_in = jnp.dtype(x.dtype).itemsize
    itemsize_out = jnp.dtype(out_dtype).itemsize
    cost = pl.CostEstimate(
        flops=2 * N * HW * C_in * C_out,
        transcendentals=0,
        bytes_accessed=(N * C_in * HW * itemsize_in
                        + C_out * C_in * itemsize_in
                        + C_out * 4
                        + N * C_out * HW * itemsize_out),
    )

    out = pl.pallas_call(
        _pointwise_conv_kernel,
        out_shape=jax.ShapeDtypeStruct((N, C_out, HW), out_dtype),
        grid_spec=pltpu.PrefetchScalarGridSpec(
            num_scalar_prefetch=0,
            grid=grid,
            in_specs=[
                pl.BlockSpec((1, C_in, ts), lambda n, co, s: (n, 0, s)),
                pl.BlockSpec((tc, C_in), lambda n, co, s: (co, 0)),
                pl.BlockSpec((tc, 1), lambda n, co, s: (co, 0)),
            ],
            out_specs=pl.BlockSpec((1, tc, ts), lambda n, co, s: (n, co, s)),
        ),
        compiler_params=pltpu.CompilerParams(
            dimension_semantics=("parallel", "parallel", "parallel"),
            vmem_limit_bytes=64 * 1024 * 1024,
        ),
        cost_estimate=cost,
    )(x, weight, b)

    # Free reshape back to NCHW.
    return out.reshape(N, C_out, H, W)


if __name__ == "__main__":
    key = jax.random.PRNGKey(0)
    kx, kw, kb = jax.random.split(key, 3)

    N, C_in, H, W = 2, 4, 16, 16
    C_out = 8

    x = jax.random.normal(kx, (N, C_in, H, W), dtype=jnp.float32)
    # Deterministic synthetic params (shapes match nn.Conv2d(C_in, C_out, 1)).
    weight = jax.random.normal(kw, (C_out, C_in), dtype=jnp.float32) * 0.1
    bias = jax.random.normal(kb, (C_out,), dtype=jnp.float32) * 0.1

    # Reference in plain JAX (same math as nn.Conv2d with a 1x1 kernel).
    ref = jnp.einsum("nchw,oc->nohw", x, weight) + bias[None, :, None, None]

    # Exact f32 path (matches the PyTorch module's float32 semantics).
    out = jax.block_until_ready(pointwise_conv(x, weight, bias))
    assert out.shape == (N, C_out, H, W)
    assert out.dtype == x.dtype
    assert jnp.allclose(out, ref, atol=1e-5, rtol=1e-5)

    # bf16 data-movement path: halves HBM traffic for this mem-bound op while
    # accumulating in f32; looser tolerance because inputs are rounded to bf16.
    out_bf16 = jax.block_until_ready(
        pointwise_conv(x, weight, bias, compute_dtype=jnp.bfloat16))
    assert out_bf16.shape == (N, C_out, H, W)
    assert jnp.allclose(out_bf16, ref, atol=3e-2, rtol=3e-2)

    print("KERNEL_OK")
</pallas_src>

<mosaic_0001>
module attributes {stable_mosaic.version = 11 : i64} {
  func.func @_pointwise_conv_kernel(%arg0: i32, %arg1: i32, %arg2: i32, %arg3: memref<1x4x256xf32, #tpu.memory_space<vmem>>, %arg4: memref<8x4xf32, #tpu.memory_space<vmem>>, %arg5: memref<8x1xf32, #tpu.memory_space<vmem>>, %arg6: memref<1x8x256xf32, #tpu.memory_space<vmem>>) attributes {dimension_semantics = [#tpu.dimension_semantics<parallel>, #tpu.dimension_semantics<parallel>, #tpu.dimension_semantics<parallel>], iteration_bounds = array<i64: 2, 1, 1>, scalar_prefetch = 0 : i64, scratch_operands = 0 : i64, tpu.core_type = #tpu.core_type<tc>, window_params = [{transform_indices = @transform_0, window_bounds = array<i64: 1, 4, 256>}, {transform_indices = @transform_1, window_bounds = array<i64: 8, 4>}, {transform_indices = @transform_2, window_bounds = array<i64: 8, 1>}, {transform_indices = @transform_3, window_bounds = array<i64: 1, 8, 256>}]} {
    %c0 = arith.constant 0 : index
    %c0_0 = arith.constant 0 : index
    %0 = vector.load %arg4[%c0, %c0_0] : memref<8x4xf32, #tpu.memory_space<vmem>>, vector<8x4xf32>
    %c0_1 = arith.constant 0 : index
    %c0_2 = arith.constant 0 : index
    %c0_3 = arith.constant 0 : index
    %1 = vector.load %arg3[%c0_1, %c0_2, %c0_3] : memref<1x4x256xf32, #tpu.memory_space<vmem>>, vector<1x4x256xf32>
    %2 = vector.shape_cast %1 : vector<1x4x256xf32> to vector<4x256xf32>
    %cst = arith.constant dense<0.000000e+00> : vector<8x256xf32>
    %3 = tpu.matmul %0, %2, %cst {dimension_numbers = #tpu.dot_dimension_numbers<[1], [0], [0], [1], [0, 0, 1, 1], [], []>} : vector<8x4xf32>, vector<4x256xf32>, vector<8x256xf32> -> vector<8x256xf32>
    %c0_4 = arith.constant 0 : index
    %c0_5 = arith.constant 0 : index
    %4 = vector.load %arg5[%c0_4, %c0_5] : memref<8x1xf32, #tpu.memory_space<vmem>>, vector<8x1xf32>
    %5 = vector.broadcast %4 : vector<8x1xf32> to vector<8x256xf32>
    %6 = arith.addf %3, %5 : vector<8x256xf32>
    %c0_6 = arith.constant 0 : index
    %c0_7 = arith.constant 0 : index
    %c0_8 = arith.constant 0 : index
    %7 = vector.load %arg6[%c0_6, %c0_7, %c0_8] : memref<1x8x256xf32, #tpu.memory_space<vmem>>, vector<1x8x256xf32>
    %8 = vector.shape_cast %7 : vector<1x8x256xf32> to vector<8x256xf32>
    %9 = vector.shape_cast %6 : vector<8x256xf32> to vector<1x8x256xf32>
    tpu.vector_store %arg6[%c0_6, %c0_7, %c0_8], %9 {strides = array<i32>} : memref<1x8x256xf32, #tpu.memory_space<vmem>>, vector<1x8x256xf32>,
    return
  }
  func.func @transform_0(%arg0: i32, %arg1: i32, %arg2: i32) -> (i32, i32, i32) {
    %c0_i32 = arith.constant 0 : i32
    %c0_i32_0 = arith.constant 0 : i32
    return %arg0, %c0_i32, %arg2 : i32, i32, i32
  }
  func.func @transform_1(%arg0: i32, %arg1: i32, %arg2: i32) -> (i32, i32) {
    %c0_i32 = arith.constant 0 : i32
    %c0_i32_0 = arith.constant 0 : i32
    return %arg1, %c0_i32 : i32, i32
  }
  func.func @transform_2(%arg0: i32, %arg1: i32, %arg2: i32) -> (i32, i32) {
    %c0_i32 = arith.constant 0 : i32
    %c0_i32_0 = arith.constant 0 : i32
    return %arg1, %c0_i32 : i32, i32
  }
  func.func @transform_3(%arg0: i32, %arg1: i32, %arg2: i32) -> (i32, i32, i32) {
    %c0_i32 = arith.constant 0 : i32
    return %arg0, %arg1, %arg2 : i32, i32, i32
  }
}

</mosaic_0001>

<llo_original>
// kernel: tpu_custom_call.1
$region0: #{tpu_custom_call.1}
  #allocation0 [shape = 'u32[]', space=smem, size = 0x4, offset = 0x4, fixed_abs, tag = 'smem constant byte address 0x4 - core index']
  #allocation1 [shape = 'u32[144,128]{1,0:T(1,128)}', space=vmem, size = 0x12000, scoped, tag = 'internal scratch']
  %s0 = inlined_call_operand.hbm [shape: f32[2,4,256], index: 0, kind: input, shape index: {}]
  %s1 = inlined_call_operand.hbm [shape: f32[8,4], index: 1, kind: input, shape index: {}]
  %s2 = inlined_call_operand.hbm [shape: f32[8,1], index: 2, kind: input, shape index: {}]
  %s3 = inlined_call_operand.hbm [shape: f32[2,8,256], index: 3, kind: output, shape index: {}]
  %s4 = sld [smem:[#allocation0]]
  $region57: #{tpu_custom_call.1} parent=0
    _
  %s6 = ssub.s32 1, %s4
  %s7 = scalar_select 0, %s6, %s4
  $region1: #{tpu_custom_call.1} parent=0
    #allocation2 [shape = 'u8[8192]{0}', space=vmem, size = 0x2000, scoped, tag = 'input window, operand 0']
    #allocation3 [shape = 's32[2]{0}', space=sflag, size = 0x8, scoped, tag = 'scoped memory for tpu_custom_call.1']
    #allocation4 [shape = 's32[2]{0}', space=sflag, size = 0x8, scoped, tag = 'scoped memory for tpu_custom_call.1']
    #allocation5 [shape = 'u8[4096]{0}', space=vmem, size = 0x1000, scoped, tag = 'input window, operand 1, single buffered']
    #allocation6 [shape = 's32[1]{0}', space=sflag, size = 0x4, scoped, tag = 'scoped memory for tpu_custom_call.1']
    #allocation7 [shape = 'u8[4096]{0}', space=vmem, size = 0x1000, scoped, tag = 'input window, operand 2, single buffered']
    #allocation8 [shape = 'u8[16384]{0}', space=vmem, size = 0x4000, scoped, tag = 'output window, operand 0']
    %8 = vsyncpa [#allocation3], 0
    %s9 = scalar_lea.sflag [#allocation3], 1
    %10 = vsyncpa %s9, 0
    %11 = vsyncpa [#allocation6], 0
    %12 = vsyncpa [#allocation4], 0
    %s13 = scalar_lea.sflag [#allocation4], 1
    %14 = vsyncpa %s13, 0
    loop: start=0, step=1, limit=4
    $region2: #{tpu_custom_call.1} parent=1 // loop_pre_header
      _
    $region3: #{tpu_custom_call.1} parent=1 // loop_header
      %s16 = sphi 0, %s20
      %p17 = scmp.ge.s32.totalorder %s16, 4
      %s23 = sphi 0, %s42
      %s24 = sphi 0, %s38
      %s25 = sphi 0, %s34
      %s26 = sphi 0, %s23
      %s27 = sphi 0, %s24
      %s28 = sphi 0, %s25
      %s29 = sphi 0, %s26
      %s30 = sphi 0, %s27
      %s31 = sphi 0, %s28
      %s47 = sphi 0, %s49
      %s50 = sphi 0, %s47
      %s51 = sphi 0, %s50
      %s67 = sphi 0, %s51
      %s73 = sphi 0, %s75
      %s76 = sphi 0, %s73
      %s77 = sphi 0, %s76
      %s93 = sphi 0, %s77
      %s99 = sphi 0, %s101
      %s102 = sphi 0, %s99
      %s103 = sphi 0, %s102
      %s119 = sphi 0, %s103
      %s129 = sphi 0, %s131
      %s132 = sphi 0, %s129
      %s133 = sphi 0, %s132
      %s149 = sphi 0, %s133
    $region4: #{tpu_custom_call.1} parent=1 // loop_header_branch
      %19 = sbr.rel (%p17) target = $region8
    $region5: #{tpu_custom_call.1} parent=1 // loop_body
      %s21 = ssub.s32 %s16, 1
      %s22 = ssub.s32 %s16, 2
      %s32 = sadd.s32 1, %s25
      %p33 = scmp.ge.s32.totalorder %s32, 1
      %s34 = scalar_select %p33, 0, %s32
      %s35 = sadd.s32 1, %s24
      %s36 = scalar_select %p33, %s35, %s24
      %p37 = scmp.ge.s32.totalorder %s36, 1
      %s38 = scalar_select %p37, 0, %s36
      %s39 = sadd.s32 1, %s23
      %s40 = scalar_select %p37, %s39, %s23
      %p41 = scmp.ge.s32.totalorder %s40, 2
      %s42 = scalar_select %p41, 0, %s40
      %s43 = ssub.s32 %s23, %s42
      %s44 = ssub.s32 %s25, %s34
      %s45 = sor.u32 %s43, %s44
      %p46 = scmp.eq.s32.totalorder %s45, 0
      %s48 = sadd.s32 %s47, 1
      %s49 = scalar_select %p46, %s47, %s48
      %p52 = pneg %p46
      %p53 = scmp.eq.s32.totalorder %s16, 1
      %p54 = por %p52, %p53
      %p55 = scmp.ne.s32.totalorder %s47, %s50
      %p56 = scmp.eq.s32.totalorder %s16, 0
      %p57 = por %p55, %p56
      %p58 = scmp.ne.s32.totalorder %s47, %s50
      %p59 = scmp.eq.s32.totalorder %s21, 1
      %p60 = por %p58, %p59
      %p61 = scmp.ne.s32.totalorder %s50, %s51
      %p62 = scmp.eq.s32.totalorder %s21, 0
      %p63 = por %p61, %p62
      %p64 = scmp.ne.s32.totalorder %s50, %s51
      %p65 = scmp.eq.s32.totalorder %s22, 1
      %p66 = por %p64, %p65
      %p68 = scmp.ne.s32.totalorder %s51, %s67
      %p69 = scmp.eq.s32.totalorder %s22, 0
      %p70 = por %p68, %p69
      %s71 = ssub.s32 %s24, %s38
      %p72 = scmp.eq.s32.totalorder %s71, 0
      %s74 = sadd.s32 %s73, 1
      %s75 = scalar_select %p72, %s73, %s74
      %p78 = pneg %p72
      %p79 = scmp.eq.s32.totalorder %s16, 1
      %p80 = por %p78, %p79
      %p81 = scmp.ne.s32.totalorder %s73, %s76
      %p82 = scmp.eq.s32.totalorder %s16, 0
      %p83 = por %p81, %p82
      %p84 = scmp.ne.s32.totalorder %s73, %s76
      %p85 = scmp.eq.s32.totalorder %s21, 1
      %p86 = por %p84, %p85
      %p87 = scmp.ne.s32.totalorder %s76, %s77
      %p88 = scmp.eq.s32.totalorder %s21, 0
      %p89 = por %p87, %p88
      %p90 = scmp.ne.s32.totalorder %s76, %s77
      %p91 = scmp.eq.s32.totalorder %s22, 1
      %p92 = por %p90, %p91
      %p94 = scmp.ne.s32.totalorder %s77, %s93
      %p95 = scmp.eq.s32.totalorder %s22, 0
      %p96 = por %p94, %p95
      %s97 = ssub.s32 %s24, %s38
      %p98 = scmp.eq.s32.totalorder %s97, 0
      %s100 = sadd.s32 %s99, 1
      %s101 = scalar_select %p98, %s99, %s100
      %p104 = pneg %p98
      %p105 = scmp.eq.s32.totalorder %s16, 1
      %p106 = por %p104, %p105
      %p107 = scmp.ne.s32.totalorder %s99, %s102
      %p108 = scmp.eq.s32.totalorder %s16, 0
      %p109 = por %p107, %p108
      %p110 = scmp.ne.s32.totalorder %s99, %s102
      %p111 = scmp.eq.s32.totalorder %s21, 1
      %p112 = por %p110, %p111
      %p113 = scmp.ne.s32.totalorder %s102, %s103
      %p114 = scmp.eq.s32.totalorder %s21, 0
      %p115 = por %p113, %p114
      %p116 = scmp.ne.s32.totalorder %s102, %s103
      %p117 = scmp.eq.s32.totalorder %s22, 1
      %p118 = por %p116, %p117
      %p120 = scmp.ne.s32.totalorder %s103, %s119
      %p121 = scmp.eq.s32.totalorder %s22, 0
      %p122 = por %p120, %p121
      %s123 = ssub.s32 %s23, %s42
      %s124 = ssub.s32 %s24, %s38
      %s125 = sor.u32 %s123, %s124
      %s126 = ssub.s32 %s25, %s34
      %s127 = sor.u32 %s125, %s126
      %p128 = scmp.eq.s32.totalorder %s127, 0
      %s130 = sadd.s32 %s129, 1
      %s131 = scalar_select %p128, %s129, %s130
      %p134 = pneg %p128
      %p135 = scmp.eq.s32.totalorder %s16, 1
      %p136 = por %p134, %p135
      %p137 = scmp.ne.s32.totalorder %s129, %s132
      %p138 = scmp.eq.s32.totalorder %s16, 0
      %p139 = por %p137, %p138
      %p140 = scmp.ne.s32.totalorder %s129, %s132
      %p141 = scmp.eq.s32.totalorder %s21, 1
      %p142 = por %p140, %p141
      %p143 = scmp.ne.s32.totalorder %s132, %s133
      %p144 = scmp.eq.s32.totalorder %s21, 0
      %p145 = por %p143, %p144
      %p146 = scmp.ne.s32.totalorder %s132, %s133
      %p147 = scmp.eq.s32.totalorder %s22, 1
      %p148 = por %p146, %p147
      %p150 = scmp.ne.s32.totalorder %s133, %s149
      %p151 = scmp.eq.s32.totalorder %s22, 0
      %p152 = por %p150, %p151
      %p153 = scmp.le.s32.totalorder 1, %s16
      %p154 = scmp.lt.s32.totalorder %s16, 3
      %p155 = pnand %p153, %p154
      %p156 = pneg %p155
      // Predicated region
      $region9: #{tpu_custom_call.1} parent=5 // pred_check
        _
      $region10: #{tpu_custom_call.1} parent=5 // pred_check_branch
        %158 = sbr.rel (%p155) target = $region12
      $region11: #{tpu_custom_call.1} parent=5 // pred_region
        %s159 = ssub.s32 %s16, 1
        // Predicated region
        $region13: #{tpu_custom_call.1} parent=11 // pred_check
          %p160 = pneg %p89
        $region14: #{tpu_custom_call.1} parent=11 // pred_check_branch
          %162 = sbr.rel (%p160) target = $region16
        $region15: #{tpu_custom_call.1} parent=11 // pred_region
          %s164 = ssub.s32 128, 128
          %165 = vsyncadd [#allocation6], %s164
          %s166 = smul.addr %s27, 128
          %s167 = scalar_lea.hbm %s1, %s166
          %s169 = sshll.u32 [#allocation5], 4
          %s170 = int_to_ptr.vmem [resolvable:$true] %s169
          %172 = dma.hbm_to_vmem [thread:$0]  %s167, 128, %s170, [#allocation6]
        $region16: #{tpu_custom_call.1} parent=11 // pred_fallthru
          _
        // Predicated region
        $region17: #{tpu_custom_call.1} parent=11 // pred_check
          %p173 = pneg %p115
        $region18: #{tpu_custom_call.1} parent=11 // pred_check_branch
          %175 = sbr.rel (%p173) target = $region20
        $region19: #{tpu_custom_call.1} parent=11 // pred_region
          %s177 = ssub.s32 128, 128
          %178 = vsyncadd [#allocation6], %s177
          %s179 = smul.addr %s27, 128
          %s180 = scalar_lea.hbm %s2, %s179
          %s182 = sshll.u32 [#allocation7], 4
          %s183 = int_to_ptr.vmem [resolvable:$true] %s182
          %185 = dma.hbm_to_vmem [thread:$0]  %s180, 128, %s183, [#allocation6]
        $region20: #{tpu_custom_call.1} parent=11 // pred_fallthru
          _
      $region12: #{tpu_custom_call.1} parent=5 // pred_fallthru
        _
      %p186 = scmp.lt.s32.totalorder %s16, 2
      // Predicated region
      $region21: #{tpu_custom_call.1} parent=5 // pred_check
        %p187 = pneg %p186
      $region22: #{tpu_custom_call.1} parent=5 // pred_check_branch
        %189 = sbr.rel (%p187) target = $region24
      $region23: #{tpu_custom_call.1} parent=5 // pred_region
        // Predicated region
        $region25: #{tpu_custom_call.1} parent=23 // pred_check
          %p190 = pneg %p57
        $region26: #{tpu_custom_call.1} parent=23 // pred_check_branch
          %192 = sbr.rel (%p190) target = $region28
        $region27: #{tpu_custom_call.1} parent=23 // pred_region
          %s193 = sand.u32 %s47, 1
          %s194 = scalar_lea.sflag [#allocation3], %s193
          %s195 = sand.u32 %s47, 1
          %s196 = smul.addr %s195, 8
          %s197 = scalar_lea.vmem [#allocation2], %s196
          %s198 = smul.u32 2, %s25
          %s200 = ssub.s32 128, 128
          %201 = vsyncadd %s194, %s200
          %s202 = smul.addr %s23, 2
          %s203 = sadd.s32 %s198, %s202
          %s204 = smul.addr %s203, 64
          %s205 = scalar_lea.hbm %s0, %s204
          %s207 = sshll.u32 %s197, 4
          %s208 = int_to_ptr.vmem [resolvable:$true] %s207
          %210 = dma.hbm_to_vmem [thread:$0]  %s205, 128, %s208, %s194
        $region28: #{tpu_custom_call.1} parent=23 // pred_fallthru
          _
      $region24: #{tpu_custom_call.1} parent=5 // pred_fallthru
        _
      %p211 = scmp.le.s32.totalorder 1, %s16
      %p212 = scmp.lt.s32.totalorder %s16, 3
      %p213 = pnand %p211, %p212
      %p214 = pneg %p213
      // Predicated region
      $region29: #{tpu_custom_call.1} parent=5 // pred_check
        _
      $region30: #{tpu_custom_call.1} parent=5 // pred_check_branch
        %216 = sbr.rel (%p213) target = $region32
      $region31: #{tpu_custom_call.1} parent=5 // pred_region
        %s217 = ssub.s32 %s16, 1
        %s218 = sand.u32 %s50, 1
        %s219 = scalar_lea.sflag [#allocation3], %s218
        %s220 = sand.u32 %s50, 1
        %s221 = smul.addr %s220, 8
        %s222 = scalar_lea.vmem [#allocation2], %s221
        // Predicated region
        $region33: #{tpu_custom_call.1} parent=31 // pred_check
          %p223 = pneg %p63
        $region34: #{tpu_custom_call.1} parent=31 // pred_check_branch
          %225 = sbr.rel (%p223) target = $region36
        $region35: #{tpu_custom_call.1} parent=31 // pred_region
          %226 = dma.done %s219, 128
        $region36: #{tpu_custom_call.1} parent=31 // pred_fallthru
          _
        // Predicated region
        $region37: #{tpu_custom_call.1} parent=31 // pred_check
          %p227 = pneg %p89
        $region38: #{tpu_custom_call.1} parent=31 // pred_check_branch
          %229 = sbr.rel (%p227) target = $region40
        $region39: #{tpu_custom_call.1} parent=31 // pred_region
          %230 = dma.done [#allocation6], 128
        $region40: #{tpu_custom_call.1} parent=31 // pred_fallthru
          _
        // Predicated region
        $region41: #{tpu_custom_call.1} parent=31 // pred_check
          %p231 = pneg %p115
        $region42: #{tpu_custom_call.1} parent=31 // pred_check_branch
          %233 = sbr.rel (%p231) target = $region44
        $region43: #{tpu_custom_call.1} parent=31 // pred_region
          %234 = dma.done [#allocation6], 128
        $region44: #{tpu_custom_call.1} parent=31 // pred_fallthru
          _
        %s235 = sand.u32 %s50, 1
        %s236 = scalar_lea.sflag [#allocation3], %s235
        %s237 = sand.u32 %s50, 1
        %s238 = smul.addr %s237, 8
        %s239 = scalar_lea.vmem [#allocation2], %s238
        %p240 = pneg %p63
        %p241 = pneg %p60
        %p242 = pneg %p89
        %p243 = pneg %p86
        %p244 = pneg %p115
        %p245 = pneg %p112
        %p246 = pneg %p145
        %p247 = pneg %p142
        %s248 = sand.u32 %s132, 1
        %s249 = scalar_lea.sflag [#allocation4], %s248
        %s250 = sand.u32 %s132, 1
        %s251 = smul.addr %s250, 16
        %s252 = scalar_lea.vmem [#allocation8], %s251
        %s253 = smul.u32 2, %s28
        %s254 = smul.u32 2, %s28
        %v255 = vld [vmem:[#allocation5] sm:$0xff]
        %v256 = vld [vmem:[%s222] sm:$0xff]
        %v257 = vld [vmem:[#allocation7] sm:$0xff]
        %259 = vset.pattern.permute.xlu0 0
        %260 = vperm.xlu0 %259, %v257
        %v261 = vpop.permute.xlu0 %260
        %v264 = vcombine.high %v256, %v256
        %vm265 = vcmask 31744
        %v267 = vsel %vm265, %v255, 0
        %vm269 = vcmask 1043456
        %v270 = vsel %vm269, %v256, 0
        %v272 = vsel %vm269, %v264, 0
        %274 = vmatprep.subr.mxu0 %v272
        %275 = vmatpush1.msra.mxu0 %v270
        %276 = vmatprep.subr.mxu0 0.0
        %277 = vmatpush1.msra.mxu0 0.0
        %278 = vmatprep.subr.mxu0 0.0
        %279 = vmatpush1.msra.mxu0 0.0
        %280 = vmatprep.subr.mxu0 0.0
        %281 = vmatpush1.msra.mxu0 0.0
        %282 = vmatprep.subr.mxu0 0.0
        %283 = vmatpush1.msra.mxu0 0.0
        %284 = vmatprep.subr.mxu0 0.0
        %285 = vmatpush1.msra.mxu0 0.0
        %286 = vmatprep.subr.mxu0 0.0
        %287 = vmatpush1.msra.mxu0 0.0
        %288 = vmatprep.subr.mxu0 0.0
        %289 = vmatpush1.msra.mxu0 0.0
        %290 = vmatprep.subr.mxu0 0.0
        %291 = vmatpush1.msra.mxu0 0.0
        %292 = vmatprep.subr.mxu0 0.0
        %293 = vmatpush1.msra.mxu0 0.0
        %294 = vmatprep.subr.mxu0 0.0
        %295 = vmatpush1.msra.mxu0 0.0
        %296 = vmatprep.subr.mxu0 0.0
        %297 = vmatpush1.msra.mxu0 0.0
        %298 = vmatprep.subr.mxu0 0.0
        %299 = vmatpush1.msra.mxu0 0.0
        %300 = vmatprep.subr.mxu0 0.0
        %301 = vmatpush1.msra.mxu0 0.0
        %302 = vmatprep.subr.mxu0 0.0
        %303 = vmatpush1.msra.mxu0 0.0
        %304 = vmatprep.subr.mxu0 0.0
        %305 = vmatpush1.msra.mxu0 0.0
        %306 = vmatprep.subr.mxu0 0.0
        %307 = vmatpush1.msra.mxu0 0.0
        %308 = vmatprep.subr.mxu0 0.0
        %309 = vmatpush1.msra.mxu0 0.0
        %310 = vmatprep.subr.mxu0 0.0
        %311 = vmatpush1.msra.mxu0 0.0
        %312 = vmatprep.subr.mxu0 0.0
        %313 = vmatpush1.msra.mxu0 0.0
        %314 = vmatprep.subr.mxu0 0.0
        %315 = vmatpush1.msra.mxu0 0.0
        %316 = vmatprep.subr.mxu0 0.0
        %317 = vmatpush1.msra.mxu0 0.0
        %318 = vmatprep.subr.mxu0 0.0
        %319 = vmatpush1.msra.mxu0 0.0
        %320 = vmatprep.subr.mxu0 0.0
        %321 = vmatpush1.msra.mxu0 0.0
        %322 = vmatprep.subr.mxu0 0.0
        %323 = vmatpush1.msra.mxu0 0.0
        %324 = vmatprep.subr.mxu0 0.0
        %325 = vmatpush1.msra.mxu0 0.0
        %326 = vmatprep.subr.mxu0 0.0
        %327 = vmatpush1.msra.mxu0 0.0
        %328 = vmatprep.subr.mxu0 0.0
        %329 = vmatpush1.msra.mxu0 0.0
        %330 = vmatprep.subr.mxu0 0.0
        %331 = vmatpush1.msra.mxu0 0.0
        %332 = vmatprep.subr.mxu0 0.0
        %333 = vmatpush1.msra.mxu0 0.0
        %334 = vmatprep.subr.mxu0 0.0
        %335 = vmatpush1.msra.mxu0 0.0
        %336 = vmatprep.subr.mxu0 0.0
        %337 = vmatpush1.msra.mxu0 0.0
        %338 = vmatprep.mubr.f32.mxu0 0.0
        %339 = vmatmul.mubr.f32.gmra.mrb[0].mxu0 %v267
        %v340 = vpop.f32.mrb[0].mxu0
        %v341 = vadd.f32 %v261, %v340
        %v342 = vpop.f32.mrb[0].mxu0
        %v343 = vadd.f32 %v261, %v342
        %344 = vdwg.mxu0
        %345 = vst [vmem:[%s252] sm:$0xff] %v341
        %346 = vst [vmem:[%s252 + $0x8] sm:$0xff] %v343
        %s347 = sand.u32 %s132, 1
        %s348 = scalar_lea.sflag [#allocation4], %s347
        %s349 = sand.u32 %s132, 1
        %s350 = smul.addr %s349, 16
        %s351 = scalar_lea.vmem [#allocation8], %s350
        // Predicated region
        $region45: #{tpu_custom_call.1} parent=31 // pred_check
          %p352 = pneg %p142
        $region46: #{tpu_custom_call.1} parent=31 // pred_check_branch
          %354 = sbr.rel (%p352) target = $region48
        $region47: #{tpu_custom_call.1} parent=31 // pred_region
          %s355 = smul.u32 2, %s28
          %s357 = ssub.s32 256, 256
          %358 = vsyncadd %s348, %s357
          %s359 = smul.addr %s27, 2
          %s360 = sadd.s32 %s355, %s359
          %s361 = smul.addr %s26, 2
          %s362 = sadd.s32 %s360, %s361
          %s363 = smul.addr %s362, 128
          %s364 = scalar_lea.hbm %s3, %s363
          %s366 = sshll.u32 %s351, 4
          %s367 = int_to_ptr.vmem [resolvable:$true] %s366
          %369 = dma.vmem_to_hbm [thread:$0]  %s367, 256, %s364, %s348
        $region48: #{tpu_custom_call.1} parent=31 // pred_fallthru
          _
      $region32: #{tpu_custom_call.1} parent=5 // pred_fallthru
        _
      %p370 = scmp.le.s32.totalorder 2, %s16
      // Predicated region
      $region49: #{tpu_custom_call.1} parent=5 // pred_check
        %p371 = pneg %p370
      $region50: #{tpu_custom_call.1} parent=5 // pred_check_branch
        %373 = sbr.rel (%p371) target = $region52
      $region51: #{tpu_custom_call.1} parent=5 // pred_region
        %s374 = ssub.s32 %s16, 2
        // Predicated region
        $region53: #{tpu_custom_call.1} parent=51 // pred_check
          %p375 = pneg %p148
        $region54: #{tpu_custom_call.1} parent=51 // pred_check_branch
          %377 = sbr.rel (%p375) target = $region56
        $region55: #{tpu_custom_call.1} parent=51 // pred_region
          %s378 = sand.u32 %s133, 1
          %s379 = scalar_lea.sflag [#allocation4], %s378
          %s380 = sand.u32 %s133, 1
          %s381 = smul.addr %s380, 16
          %s382 = scalar_lea.vmem [#allocation8], %s381
          %383 = dma.done %s379, 256
        $region56: #{tpu_custom_call.1} parent=51 // pred_fallthru
          _
      $region52: #{tpu_custom_call.1} parent=5 // pred_fallthru
        _
    $region6: #{tpu_custom_call.1} parent=1 // loop_footer
      %s20 = sadd.s32 1, %s16
    $region7: #{tpu_custom_call.1} parent=1 // loop_footer_branch
      %15 = sbr.rel target = $region3
    $region8: #{tpu_custom_call.1} parent=1 // loop_exit
      _
    %384 = vsyncpa [#allocation3], 1
    %s385 = scalar_lea.sflag [#allocation3], 1
    %386 = vsyncpa %s385, 1
    %387 = vsyncpa [#allocation6], 1
    %388 = vsyncpa [#allocation4], 1
    %s389 = scalar_lea.sflag [#allocation4], 1
    %390 = vsyncpa %s389, 1

</llo_original>
